<compile_context>
chip_gen: v7x
topology: tpu7x:2x2x1
jax: 0.10.0
libtpu: 0.0.40
codegen_flags: <defaults>
</compile_context>

<pallas_src>
import functools

import jax
import jax.numpy as jnp
from jax.experimental import pallas as pl
from jax.experimental.pallas import tpu as pltpu


def _round_up(a: int, m: int) -> int:
    return ((a + m - 1) // m) * m


def regp_kernel(s_ref, x_ref, out_ref):
    # s_ref:   (6,) f32 in SMEM  -> [wb*w1_0, wb*w1_1, wb*w1_2, wb*w1_3, wb*b1, bb]
    # x_ref:   (8, LB) f32 in VMEM, rows 0..4 = x0..x4 (batch along lanes)
    # out_ref: (1, LB) f32 in VMEM
    w0 = s_ref[0]
    w1 = s_ref[1]
    w2 = s_ref[2]
    w3 = s_ref[3]
    b1 = s_ref[4]
    bb = s_ref[5]

    x0 = x_ref[0:1, :]                                    # (1, LB)

    # Linear(4,1) with wb folded in: y' = wb * (x[:,1:5] @ W1^T + b1)
    y = (w0 * x_ref[1:2, :]
         + w1 * x_ref[2:3, :]
         + w2 * x_ref[3:4, :]
         + w3 * x_ref[4:5, :]
         + b1)                                            # (1, LB)

    # Bilinear(1,1,1): z = x0 * wb * y + bb  (wb already folded into y)
    z = x0 * y + bb                                       # (1, LB)

    # LeakyReLU(0.01) followed by clamp(min=0) == ReLU
    out_ref[...] = jnp.maximum(z, jnp.float32(0.0))


@functools.partial(jax.jit, static_argnames=("lane_block",))
def regp_forward(x, w1, b1, wb, bb, *, lane_block: int = 2048):
    """x: (B, F) with F >= 5.  Returns (B, 1) f32, matching the PyTorch module."""
    B = x.shape[0]

    # Lane tile: multiple of 128; shrink for small batches, cap at lane_block.
    LB = lane_block if B >= lane_block else _round_up(max(B, 1), 128)
    Bp = _round_up(B, LB)
    num_tiles = Bp // LB

    # Wrapper-side layout plumbing: slice to the 5 used columns, transpose so
    # batch is the lane axis, pad sublanes to 8 and lanes to Bp.
    xt = jnp.transpose(x[:, :5].astype(jnp.float32))      # (5, B)
    xt = jnp.pad(xt, ((0, 3), (0, Bp - B)))               # (8, Bp)

    # Fold wb into the Linear parameters; pack everything into one SMEM array.
    w1f = w1.astype(jnp.float32).reshape(-1)              # (4,)
    scalars = jnp.concatenate([
        (wb * w1f).astype(jnp.float32),                   # wb*w1_0..wb*w1_3
        jnp.stack([wb * b1, bb]).astype(jnp.float32),     # wb*b1, bb
    ])                                                    # (6,)

    out = pl.pallas_call(
        regp_kernel,
        out_shape=jax.ShapeDtypeStruct((1, Bp), jnp.float32),
        grid_spec=pltpu.PrefetchScalarGridSpec(
            num_scalar_prefetch=1,
            grid=(num_tiles,),
            in_specs=[pl.BlockSpec((8, LB), lambda i, s: (0, i))],
            out_specs=pl.BlockSpec((1, LB), lambda i, s: (0, i)),
        ),
        compiler_params=pltpu.CompilerParams(
            dimension_semantics=("parallel",),
        ),
    )(scalars, xt)

    # Back to the PyTorch output layout (B, 1), dropping batch padding.
    return jnp.transpose(out[:, :B])


def regp_reference(x, w1, b1, wb, bb):
    # Exact original semantics (including the redundant LeakyReLU branch).
    y = x[:, 1:5] @ w1.T + b1                             # (B, 1)
    z = x[:, 0:1] * wb * y + bb                           # (B, 1)
    z = jnp.where(z >= 0, z, 0.01 * z)                    # LeakyReLU(0.01)
    return jnp.maximum(z, 0.0)                            # clamp(min=0)


if __name__ == "__main__":
    key = jax.random.PRNGKey(0)
    kx, kw1, kb1, kwb, kbb = jax.random.split(key, 5)

    B, F = 16, 5                                          # x: [B, F], F >= 5
    x = jax.random.normal(kx, (B, F), dtype=jnp.float32)

    # Deterministic parameter init (shapes from the module's __init__):
    #   linear1:   weight (1, 4), bias (1,)   -- U(-1/2, 1/2) like PyTorch
    #   bilinear1: weight (1, 1, 1) scalar, bias (1,) scalar -- U(-1, 1)
    w1 = jax.random.uniform(kw1, (1, 4), minval=-0.5, maxval=0.5, dtype=jnp.float32)
    b1 = jax.random.uniform(kb1, (), minval=-0.5, maxval=0.5, dtype=jnp.float32)
    wb = jax.random.uniform(kwb, (), minval=-1.0, maxval=1.0, dtype=jnp.float32)
    bb = jax.random.uniform(kbb, (), minval=-1.0, maxval=1.0, dtype=jnp.float32)

    out = regp_forward(x, w1, b1, wb, bb)
    out = jax.block_until_ready(out)

    ref = regp_reference(x, w1, b1, wb, bb)
    assert out.shape == (B, 1), out.shape
    assert jnp.allclose(out, ref, atol=1e-5, rtol=1e-5), "mismatch vs reference"

    print("KERNEL_OK")
</pallas_src>

<mosaic_0001>
module attributes {stable_mosaic.version = 11 : i64} {
  func.func @regp_kernel(%arg0: i32, %arg1: memref<6xf32, #tpu.memory_space<smem>>, %arg2: memref<8x128xf32, #tpu.memory_space<vmem>>, %arg3: memref<1x128xf32, #tpu.memory_space<vmem>>) attributes {dimension_semantics = [#tpu.dimension_semantics<parallel>], iteration_bounds = array<i64: 1>, scalar_prefetch = 1 : i64, scratch_operands = 0 : i64, tpu.core_type = #tpu.core_type<tc>, window_params = [{transform_indices = @transform_0, window_bounds = array<i64: 8, 128>}, {transform_indices = @transform_1, window_bounds = array<i64: 1, 128>}]} {
    %c0 = arith.constant 0 : index
    %0 = memref.load %arg1[%c0] : memref<6xf32, #tpu.memory_space<smem>>
    %c1 = arith.constant 1 : index
    %1 = memref.load %arg1[%c1] : memref<6xf32, #tpu.memory_space<smem>>
    %c2 = arith.constant 2 : index
    %2 = memref.load %arg1[%c2] : memref<6xf32, #tpu.memory_space<smem>>
    %c3 = arith.constant 3 : index
    %3 = memref.load %arg1[%c3] : memref<6xf32, #tpu.memory_space<smem>>
    %c4 = arith.constant 4 : index
    %4 = memref.load %arg1[%c4] : memref<6xf32, #tpu.memory_space<smem>>
    %c5 = arith.constant 5 : index
    %5 = memref.load %arg1[%c5] : memref<6xf32, #tpu.memory_space<smem>>
    %c0_0 = arith.constant 0 : index
    %c0_1 = arith.constant 0 : index
    %6 = vector.load %arg2[%c0_0, %c0_1] : memref<8x128xf32, #tpu.memory_space<vmem>>, vector<1x128xf32>
    %c1_2 = arith.constant 1 : index
    %c0_3 = arith.constant 0 : index
    %7 = vector.load %arg2[%c1_2, %c0_3] : memref<8x128xf32, #tpu.memory_space<vmem>>, vector<1x128xf32>
    %8 = vector.broadcast %0 : f32 to vector<1x128xf32>
    %9 = arith.mulf %8, %7 : vector<1x128xf32>
    %c2_4 = arith.constant 2 : index
    %c0_5 = arith.constant 0 : index
    %10 = vector.load %arg2[%c2_4, %c0_5] : memref<8x128xf32, #tpu.memory_space<vmem>>, vector<1x128xf32>
    %11 = vector.broadcast %1 : f32 to vector<1x128xf32>
    %12 = arith.mulf %11, %10 : vector<1x128xf32>
    %13 = arith.addf %9, %12 : vector<1x128xf32>
    %c3_6 = arith.constant 3 : index
    %c0_7 = arith.constant 0 : index
    %14 = vector.load %arg2[%c3_6, %c0_7] : memref<8x128xf32, #tpu.memory_space<vmem>>, vector<1x128xf32>
    %15 = vector.broadcast %2 : f32 to vector<1x128xf32>
    %16 = arith.mulf %15, %14 : vector<1x128xf32>
    %17 = arith.addf %13, %16 : vector<1x128xf32>
    %c4_8 = arith.constant 4 : index
    %c0_9 = arith.constant 0 : index
    %18 = vector.load %arg2[%c4_8, %c0_9] : memref<8x128xf32, #tpu.memory_space<vmem>>, vector<1x128xf32>
    %19 = vector.broadcast %3 : f32 to vector<1x128xf32>
    %20 = arith.mulf %19, %18 : vector<1x128xf32>
    %21 = arith.addf %17, %20 : vector<1x128xf32>
    %22 = vector.broadcast %4 : f32 to vector<1x128xf32>
    %23 = arith.addf %21, %22 : vector<1x128xf32>
    %24 = arith.mulf %6, %23 : vector<1x128xf32>
    %25 = vector.broadcast %5 : f32 to vector<1x128xf32>
    %26 = arith.addf %24, %25 : vector<1x128xf32>
    %cst = arith.constant 0.000000e+00 : f32
    %27 = vector.broadcast %cst : f32 to vector<1x128xf32>
    %28 = arith.maximumf %26, %27 : vector<1x128xf32>
    %c0_10 = arith.constant 0 : index
    %c0_11 = arith.constant 0 : index
    %29 = vector.load %arg3[%c0_10, %c0_11] : memref<1x128xf32, #tpu.memory_space<vmem>>, vector<1x128xf32>
    tpu.vector_store %arg3[%c0_10, %c0_11], %28 {strides = array<i32>} : memref<1x128xf32, #tpu.memory_space<vmem>>, vector<1x128xf32>,
    return
  }
  func.func @transform_0(%arg0: i32, %arg1: memref<6xf32, #tpu.memory_space<smem>>) -> (i32, i32) {
    %c0_i32 = arith.constant 0 : i32
    %c0_i32_0 = arith.constant 0 : i32
    return %c0_i32, %arg0 : i32, i32
  }
  func.func @transform_1(%arg0: i32, %arg1: memref<6xf32, #tpu.memory_space<smem>>) -> (i32, i32) {
    %c0_i32 = arith.constant 0 : i32
    %c0_i32_0 = arith.constant 0 : i32
    return %c0_i32, %arg0 : i32, i32
  }
}

</mosaic_0001>

<llo_original>
// kernel: regp_forward.1
$region0: #{regp_forward.1}
  #allocation0 [shape = 'u32[]', space=smem, size = 0x4, offset = 0x4, fixed_abs, tag = 'smem constant byte address 0x4 - core index']
  #allocation1 [shape = 'u32[144,128]{1,0:T(1,128)}', space=vmem, size = 0x12000, scoped, tag = 'internal scratch']
  #allocation2 [shape = 's32[1]{0}', space=sflag, size = 0x4, scoped, tag = 'scoped memory for regp_forward.1']
  #allocation3 [shape = 'u8[512]{0}', space=smem, size = 0x200, scoped, tag = 'prefetched SMEM operand 0']
  %s0 = inlined_call_operand.vmem [shape: f32[6], index: 0, kind: input, shape index: {}]
  %s1 = inlined_call_operand.vmem [shape: f32[8,128], index: 1, kind: input, shape index: {}]
  %s2 = inlined_call_operand.vmem [shape: f32[1,128], index: 2, kind: output, shape index: {}]
  %s3 = sld [smem:[#allocation0]]
  $region14: #{regp_forward.1} parent=0
    _
  %s5 = ssub.s32 1, %s3
  %s6 = scalar_select 0, %s5, %s3
  %s7 = sshll.u32 %s0, 4
  %s8 = int_to_ptr.vmem [resolvable:$true] %s7
  %10 = dma.vmem_to_smem %s8, 16, [#allocation3], [#allocation2]
  %11 = dma.done [#allocation2], 16
  %12 = sfence
  // Predicated region
  $region2: #{regp_forward.1} parent=0 // pred_check
    _
  $region3: #{regp_forward.1} parent=0 // pred_check_branch
    %14 = sbr.rel (0) target = $region5
  $region4: #{regp_forward.1} parent=0 // pred_region
    _
  $region5: #{regp_forward.1} parent=0 // pred_fallthru
    _
  %s15 = sld [smem:[#allocation3]]
  %s16 = sld [smem:[#allocation3 + $0x1]]
  %s17 = sld [smem:[#allocation3 + $0x2]]
  %s18 = sld [smem:[#allocation3 + $0x3]]
  %s19 = sld [smem:[#allocation3 + $0x4]]
  %s20 = sld [smem:[#allocation3 + $0x5]]
  %v21 = vld [vmem:[%s1] sm:$0x1]
  %v22 = vld [vmem:[%s1 + $0x1] sm:$0x1]
  %v23 = vstv %s15
  %v24 = vmul.f32 %v23, %v22
  %v25 = vld [vmem:[%s1 + $0x2] sm:$0x1]
  %v26 = vstv %s16
  %v27 = vmul.f32 %v26, %v25
  %v28 = vadd.f32 %v24, %v27
  %v29 = vld [vmem:[%s1 + $0x3] sm:$0x1]
  %v30 = vstv %s17
  %v31 = vmul.f32 %v30, %v29
  %v32 = vadd.f32 %v28, %v31
  %v33 = vld [vmem:[%s1 + $0x4] sm:$0x1]
  %v34 = vstv %s18
  %v35 = vmul.f32 %v34, %v33
  %v36 = vadd.f32 %v32, %v35
  %v37 = vstv %s19
  %v38 = vadd.f32 %v36, %v37
  %v39 = vmul.f32 %v21, %v38
  %v40 = vstv %s20
  %v41 = vadd.f32 %v39, %v40
  %v42 = vmax.f32 %v41, 0.0
  %43 = vst [vmem:[%s2] sm:$0x1] %v42
  // Predicated region
  $region6: #{regp_forward.1} parent=0 // pred_check
    _
  $region7: #{regp_forward.1} parent=0 // pred_check_branch
    %45 = sbr.rel (0) target = $region9
  $region8: #{regp_forward.1} parent=0 // pred_region
    _
  $region9: #{regp_forward.1} parent=0 // pred_fallthru
    _
  // Predicated region
  $region10: #{regp_forward.1} parent=0 // pred_check
    _
  $region11: #{regp_forward.1} parent=0 // pred_check_branch
    %47 = sbr.rel (0) target = $region13
  $region12: #{regp_forward.1} parent=0 // pred_region
    _
  $region13: #{regp_forward.1} parent=0 // pred_fallthru
    _

</llo_original>
